<compile_context>
chip_gen: v6e
topology: v6e:2x2x1
jax: 0.10.0
libtpu: 0.0.40
codegen_flags: <defaults>
</compile_context>

<pallas_src>
import functools

import jax
import jax.numpy as jnp
from jax.experimental import pallas as pl
from jax.experimental.pallas import tpu as pltpu

SUBLANE = 8
LANE = 128
LN_EPS = 1e-5


def _round_up(x: int, m: int) -> int:
    return (x + m - 1) // m * m


# ---------------------------------------------------------------------------
# Fused kernel: the whole embedding stack for one tile of rows.
# ---------------------------------------------------------------------------
def _fused_stack_kernel(true_out_dims, eps, x_ref, m_ref, *refs):
    """refs = (w0, b0, g0, be0, w1, b1, g1, be1, ..., o_ref).

    x_ref: [TILE_N, in_pad]    flattened (B*T) activations (zero padded cols)
    m_ref: [TILE_N, 1]         sequence mask as float (1.0 real / 0.0 padding)
    wK:    [din_pad, dout_pad] zero-padded weights (true block in top-left)
    bK/gK/beK: [1, dout_pad]   bias / LN gamma / LN beta (zero padded)
    o_ref: [TILE_N, dout_pad]  lane-dense output (valid cols = true hidden dim)
    """
    o_ref = refs[-1]
    p_refs = refs[:-1]

    h = x_ref[...]
    for li, d_true in enumerate(true_out_dims):
        w_ref, b_ref, g_ref, be_ref = p_refs[4 * li: 4 * li + 4]
        # MXU matmul (f32 accumulate) + bias. Padded K rows of W are zero.
        z = jnp.dot(h, w_ref[...], preferred_element_type=jnp.float32) + b_ref[...]
        # GELU (tanh approximation -> EUP path). gelu(0) == 0, so padded
        # columns stay exactly zero.
        z = jax.nn.gelu(z, approximate=True)

        # LayerNorm over the TRUE feature width (padded cols are exactly 0,
        # so the sum over the padded width equals the sum over valid cols).
        d_pad = z.shape[-1]
        inv_d = 1.0 / float(d_true)
        mean = jnp.sum(z, axis=-1, keepdims=True) * inv_d
        cen = z - mean
        if d_true != d_pad:
            col = jax.lax.broadcasted_iota(jnp.int32, (1, d_pad), 1)
            cen = cen * (col < d_true).astype(jnp.float32)
        var = jnp.sum(cen * cen, axis=-1, keepdims=True) * inv_d
        # gamma/beta are zero in padded cols -> padded output cols stay 0.
        h = cen * jax.lax.rsqrt(var + eps) * g_ref[...] + be_ref[...]

    # Sequence mask applied once at the end (equivalent to per-block masking
    # for this row-wise stack). Lane-dense 128-wide store.
    o_ref[...] = (h * m_ref[...]).astype(o_ref.dtype)


# ---------------------------------------------------------------------------
# Parameter prep: pad every layer's params to (sublane, lane)-friendly shapes.
# ---------------------------------------------------------------------------
def _prepare_padded_params(params, input_dim):
    padded = []
    true_out_dims = []
    in_pad = _round_up(max(input_dim, 1), SUBLANE)
    out_pad = in_pad
    for (w, b, gamma, beta) in params:
        d_in, d_out = w.shape
        out_pad = _round_up(d_out, LANE)
        w_p = jnp.zeros((in_pad, out_pad), jnp.float32).at[:d_in, :d_out].set(w)
        b_p = jnp.zeros((1, out_pad), jnp.float32).at[:, :d_out].set(
            b.reshape(1, d_out))
        g_p = jnp.zeros((1, out_pad), jnp.float32).at[:, :d_out].set(
            gamma.reshape(1, d_out))
        be_p = jnp.zeros((1, out_pad), jnp.float32).at[:, :d_out].set(
            beta.reshape(1, d_out))
        padded.extend([w_p, b_p, g_p, be_p])
        true_out_dims.append(d_out)
        in_pad = out_pad
    return padded, tuple(true_out_dims), out_pad


def embedding_stack_fused(x, mask_f, params, input_dim, *, tile_rows=512):
    """Run the whole embedding stack in one row-tiled pallas_call.

    x:      [N, input_dim] float32 (N = B*T, any row order)
    mask_f: [N, 1] float32 (1.0 real / 0.0 padding)
    Returns [N, hidden_dim] float32 (masked rows are exactly zero).
    """
    n, _ = x.shape
    hidden_dim = params[-1][0].shape[1]

    padded_params, true_out_dims, final_pad = _prepare_padded_params(
        params, input_dim)
    in_pad = padded_params[0].shape[0]

    # Row tiling: biggest tile that fits comfortably; pad N up to a multiple.
    tile_n = min(tile_rows, _round_up(n, SUBLANE))
    n_pad = _round_up(n, tile_n)

    if in_pad != input_dim or n_pad != n:
        x = jnp.pad(x, ((0, n_pad - n), (0, in_pad - input_dim)))
    if n_pad != n:
        mask_f = jnp.pad(mask_f, ((0, n_pad - n), (0, 0)))

    in_specs = [
        pl.BlockSpec((tile_n, in_pad), lambda i: (i, 0)),   # activations
        pl.BlockSpec((tile_n, 1), lambda i: (i, 0)),        # sequence mask
    ]
    for p in padded_params:                                  # resident params
        in_specs.append(pl.BlockSpec(p.shape, lambda i: (0, 0)))

    kernel = functools.partial(_fused_stack_kernel, true_out_dims, LN_EPS)

    y = pl.pallas_call(
        kernel,
        out_shape=jax.ShapeDtypeStruct((n_pad, final_pad), jnp.float32),
        grid=(n_pad // tile_n,),
        in_specs=in_specs,
        out_specs=pl.BlockSpec((tile_n, final_pad), lambda i: (i, 0)),
        compiler_params=pltpu.CompilerParams(
            dimension_semantics=("parallel",),
            vmem_limit_bytes=32 << 20,
        ),
    )(x, mask_f, *padded_params)

    return y[:n, :hidden_dim]


# ---------------------------------------------------------------------------
# Parameter init (dims double from initial_embedding_dim up to hidden_dim).
# ---------------------------------------------------------------------------
def init_embedding_stack_params(key, input_dim, initial_embedding_dim, hidden_dim):
    dims = [input_dim, initial_embedding_dim]
    d = initial_embedding_dim
    while 2 * d < hidden_dim:
        d *= 2
        dims.append(d)
    dims.append(hidden_dim)

    params = []
    for d_in, d_out in zip(dims[:-1], dims[1:]):
        key, k_w = jax.random.split(key)
        w = jax.random.normal(k_w, (d_in, d_out), jnp.float32) / jnp.sqrt(float(d_in))
        b = jnp.zeros((1, d_out), jnp.float32)
        gamma = jnp.ones((1, d_out), jnp.float32)
        beta = jnp.zeros((1, d_out), jnp.float32)
        params.append((w, b, gamma, beta))
    return params


# ---------------------------------------------------------------------------
# Forward pass mirroring SequentialVectorEmbedding.forward.
# ---------------------------------------------------------------------------
def sequential_vector_embedding(vectors, time, mask, params,
                                mask_sequence_vectors=True, tile_rows=512):
    """vectors: [B, T, I] float32; time: [B, 1] (unused); mask: [B, T] bool.

    Returns (encoded [T,B,D], padding_mask [B,T], sequence_mask [T,B,1],
             global_mask [T]).
    """
    del time  # not used in the reference forward
    batch_size, max_vectors, input_dim = vectors.shape
    hidden_dim = params[-1][0].shape[1]

    padding_mask = jnp.logical_not(mask)                          # [B, T] bool
    sequence_mask = jnp.transpose(mask, (1, 0))[:, :, None]       # [T, B, 1] bool
    if not mask_sequence_vectors:
        sequence_mask = jnp.ones_like(sequence_mask)
    global_mask = jnp.ones((max_vectors,), dtype=sequence_mask.dtype)  # [T]

    # Rows are independent -> flatten [B, T, I] directly; NO pre-transpose.
    n = batch_size * max_vectors
    x = vectors.reshape(n, input_dim).astype(jnp.float32)
    m_src = mask if mask_sequence_vectors else jnp.ones_like(mask)
    m_f = m_src.reshape(n, 1).astype(jnp.float32)

    y = embedding_stack_fused(x, m_f, params, input_dim, tile_rows=tile_rows)

    # Single post-kernel reorder to the module's [T, B, D] layout.
    encoded = y.reshape(batch_size, max_vectors, hidden_dim).transpose(1, 0, 2)
    return encoded, padding_mask, sequence_mask, global_mask


# ---------------------------------------------------------------------------
# Pure-JAX reference (per-block masking, unpadded dims) for validation.
# ---------------------------------------------------------------------------
def _reference_forward(vectors, mask, params, mask_sequence_vectors=True):
    h = jnp.transpose(vectors, (1, 0, 2)).astype(jnp.float32)     # [T, B, I]
    sm = jnp.transpose(mask, (1, 0))[:, :, None].astype(jnp.float32)
    if not mask_sequence_vectors:
        sm = jnp.ones_like(sm)
    for (w, b, gamma, beta) in params:
        z = jax.nn.gelu(h @ w + b, approximate=True)
        mean = jnp.mean(z, axis=-1, keepdims=True)
        var = jnp.mean((z - mean) ** 2, axis=-1, keepdims=True)
        h = (z - mean) * jax.lax.rsqrt(var + LN_EPS) * gamma + beta
        h = h * sm
    return h


if __name__ == "__main__":
    # Small, module-consistent shapes: B=2 events, T=8 jets, input_dim=4,
    # initial_embedding_dim=8, hidden_dim=32.
    B, T, I = 2, 8, 4
    INITIAL_DIM, HIDDEN_DIM = 8, 32

    key = jax.random.PRNGKey(0)
    k_vec, k_time, k_params = jax.random.split(key, 3)

    vectors = jax.random.normal(k_vec, (B, T, I), jnp.float32)
    time = jax.random.uniform(k_time, (B, 1), jnp.float32)
    # Variable-length events: event 0 has 6 real jets, event 1 has 3.
    lengths = jnp.array([6, 3], dtype=jnp.int32)
    mask = jnp.arange(T)[None, :] < lengths[:, None]              # [B, T] bool

    params = init_embedding_stack_params(k_params, I, INITIAL_DIM, HIDDEN_DIM)

    encoded, padding_mask, sequence_mask, global_mask = sequential_vector_embedding(
        vectors, time, mask, params, mask_sequence_vectors=True)
    jax.block_until_ready((encoded, padding_mask, sequence_mask, global_mask))

    assert encoded.shape == (T, B, HIDDEN_DIM)
    assert padding_mask.shape == (B, T) and padding_mask.dtype == jnp.bool_
    assert sequence_mask.shape == (T, B, 1) and sequence_mask.dtype == jnp.bool_
    assert global_mask.shape == (T,)

    # Padded jets must be exactly zeroed by the in-kernel mask multiply.
    assert float(jnp.abs(encoded[6:, 0]).max()) == 0.0
    assert float(jnp.abs(encoded[3:, 1]).max()) == 0.0

    # Match the pure-JAX reference (per-block masking, true LayerNorm width).
    ref = _reference_forward(vectors, mask, params, mask_sequence_vectors=True)
    assert jnp.allclose(encoded, ref, atol=1e-4, rtol=1e-4), \
        float(jnp.abs(encoded - ref).max())

    print("KERNEL_OK")
</pallas_src>

<mosaic_0001>
module attributes {stable_mosaic.version = 11 : i64} {
  func.func @_fused_stack_kernel(%arg0: i32, %arg1: memref<16x8xf32, #tpu.memory_space<vmem>>, %arg2: memref<16x1xf32, #tpu.memory_space<vmem>>, %arg3: memref<8x128xf32, #tpu.memory_space<vmem>>, %arg4: memref<1x128xf32, #tpu.memory_space<vmem>>, %arg5: memref<1x128xf32, #tpu.memory_space<vmem>>, %arg6: memref<1x128xf32, #tpu.memory_space<vmem>>, %arg7: memref<128x128xf32, #tpu.memory_space<vmem>>, %arg8: memref<1x128xf32, #tpu.memory_space<vmem>>, %arg9: memref<1x128xf32, #tpu.memory_space<vmem>>, %arg10: memref<1x128xf32, #tpu.memory_space<vmem>>, %arg11: memref<128x128xf32, #tpu.memory_space<vmem>>, %arg12: memref<1x128xf32, #tpu.memory_space<vmem>>, %arg13: memref<1x128xf32, #tpu.memory_space<vmem>>, %arg14: memref<1x128xf32, #tpu.memory_space<vmem>>, %arg15: memref<16x128xf32, #tpu.memory_space<vmem>>) attributes {dimension_semantics = [#tpu.dimension_semantics<parallel>], iteration_bounds = array<i64: 1>, scalar_prefetch = 0 : i64, scratch_operands = 0 : i64, tpu.core_type = #tpu.core_type<tc>, window_params = [{transform_indices = @transform_0, window_bounds = array<i64: 16, 8>}, {transform_indices = @transform_1, window_bounds = array<i64: 16, 1>}, {pipeline_mode = #tpu.pipeline_mode<synchronous>, transform_indices = @transform_2, window_bounds = array<i64: 8, 128>}, {pipeline_mode = #tpu.pipeline_mode<synchronous>, transform_indices = @transform_3, window_bounds = array<i64: 1, 128>}, {pipeline_mode = #tpu.pipeline_mode<synchronous>, transform_indices = @transform_4, window_bounds = array<i64: 1, 128>}, {pipeline_mode = #tpu.pipeline_mode<synchronous>, transform_indices = @transform_5, window_bounds = array<i64: 1, 128>}, {pipeline_mode = #tpu.pipeline_mode<synchronous>, transform_indices = @transform_6, window_bounds = array<i64: 128, 128>}, {pipeline_mode = #tpu.pipeline_mode<synchronous>, transform_indices = @transform_7, window_bounds = array<i64: 1, 128>}, {pipeline_mode = #tpu.pipeline_mode<synchronous>, transform_indices = @transform_8, window_bounds = array<i64: 1, 128>}, {pipeline_mode = #tpu.pipeline_mode<synchronous>, transform_indices = @transform_9, window_bounds = array<i64: 1, 128>}, {pipeline_mode = #tpu.pipeline_mode<synchronous>, transform_indices = @transform_10, window_bounds = array<i64: 128, 128>}, {pipeline_mode = #tpu.pipeline_mode<synchronous>, transform_indices = @transform_11, window_bounds = array<i64: 1, 128>}, {pipeline_mode = #tpu.pipeline_mode<synchronous>, transform_indices = @transform_12, window_bounds = array<i64: 1, 128>}, {pipeline_mode = #tpu.pipeline_mode<synchronous>, transform_indices = @transform_13, window_bounds = array<i64: 1, 128>}, {transform_indices = @transform_14, window_bounds = array<i64: 16, 128>}]} {
    %c0 = arith.constant 0 : index
    %c0_0 = arith.constant 0 : index
    %0 = vector.load %arg1[%c0, %c0_0] : memref<16x8xf32, #tpu.memory_space<vmem>>, vector<16x8xf32>
    %c0_1 = arith.constant 0 : index
    %c0_2 = arith.constant 0 : index
    %1 = vector.load %arg3[%c0_1, %c0_2] : memref<8x128xf32, #tpu.memory_space<vmem>>, vector<8x128xf32>
    %cst = arith.constant dense<0.000000e+00> : vector<16x128xf32>
    %2 = tpu.matmul %0, %1, %cst {dimension_numbers = #tpu.dot_dimension_numbers<[1], [0], [0], [1], [0, 0, 1, 1], [], []>} : vector<16x8xf32>, vector<8x128xf32>, vector<16x128xf32> -> vector<16x128xf32>
    %c0_3 = arith.constant 0 : index
    %c0_4 = arith.constant 0 : index
    %3 = vector.load %arg4[%c0_3, %c0_4] : memref<1x128xf32, #tpu.memory_space<vmem>>, vector<1x128xf32>
    %4 = vector.broadcast %3 : vector<1x128xf32> to vector<16x128xf32>
    %5 = arith.addf %2, %4 : vector<16x128xf32>
    %6 = arith.mulf %5, %5 : vector<16x128xf32>
    %7 = arith.mulf %5, %6 : vector<16x128xf32>
    %cst_5 = arith.constant 4.471500e-02 : f32
    %8 = vector.broadcast %cst_5 : f32 to vector<16x128xf32>
    %9 = arith.mulf %8, %7 : vector<16x128xf32>
    %10 = arith.addf %5, %9 : vector<16x128xf32>
    %cst_6 = arith.constant 0.797884583 : f32
    %11 = vector.broadcast %cst_6 : f32 to vector<16x128xf32>
    %12 = arith.mulf %11, %10 : vector<16x128xf32>
    %13 = math.tanh %12 : vector<16x128xf32>
    %cst_7 = arith.constant 1.000000e+00 : f32
    %14 = vector.broadcast %cst_7 : f32 to vector<16x128xf32>
    %15 = arith.addf %14, %13 : vector<16x128xf32>
    %cst_8 = arith.constant 5.000000e-01 : f32
    %16 = vector.broadcast %cst_8 : f32 to vector<16x128xf32>
    %17 = arith.mulf %16, %15 : vector<16x128xf32>
    %18 = arith.mulf %5, %17 : vector<16x128xf32>
    %cst_9 = arith.constant dense<0.000000e+00> : vector<16xf32>
    %19 = vector.multi_reduction <add>, %18, %cst_9 [1] : vector<16x128xf32> to vector<16xf32>
    %20 = vector.shape_cast %19 : vector<16xf32> to vector<16x1xf32>
    %cst_10 = arith.constant 1.250000e-01 : f32
    %21 = vector.broadcast %cst_10 : f32 to vector<16x1xf32>
    %22 = arith.mulf %20, %21 : vector<16x1xf32>
    %23 = vector.broadcast %22 : vector<16x1xf32> to vector<16x128xf32>
    %24 = arith.subf %18, %23 : vector<16x128xf32>
    %25 = tpu.iota {dimensions = array<i32: 1>} : vector<1x128xi32>
    %c8_i32 = arith.constant 8 : i32
    %26 = vector.broadcast %c8_i32 : i32 to vector<1x128xi32>
    %27 = arith.cmpi slt, %25, %26 : vector<1x128xi32>
    %28 = arith.extui %27 : vector<1x128xi1> to vector<1x128xi32>
    %29 = arith.sitofp %28 : vector<1x128xi32> to vector<1x128xf32>
    %30 = vector.broadcast %29 : vector<1x128xf32> to vector<16x128xf32>
    %31 = arith.mulf %24, %30 : vector<16x128xf32>
    %32 = arith.mulf %31, %31 : vector<16x128xf32>
    %cst_11 = arith.constant dense<0.000000e+00> : vector<16xf32>
    %33 = vector.multi_reduction <add>, %32, %cst_11 [1] : vector<16x128xf32> to vector<16xf32>
    %34 = vector.shape_cast %33 : vector<16xf32> to vector<16x1xf32>
    %cst_12 = arith.constant 1.250000e-01 : f32
    %35 = vector.broadcast %cst_12 : f32 to vector<16x1xf32>
    %36 = arith.mulf %34, %35 : vector<16x1xf32>
    %cst_13 = arith.constant 9.99999974E-6 : f32
    %37 = vector.broadcast %cst_13 : f32 to vector<16x1xf32>
    %38 = arith.addf %36, %37 : vector<16x1xf32>
    %39 = math.rsqrt %38 : vector<16x1xf32>
    %40 = vector.broadcast %39 : vector<16x1xf32> to vector<16x128xf32>
    %41 = arith.mulf %31, %40 : vector<16x128xf32>
    %c0_14 = arith.constant 0 : index
    %c0_15 = arith.constant 0 : index
    %42 = vector.load %arg5[%c0_14, %c0_15] : memref<1x128xf32, #tpu.memory_space<vmem>>, vector<1x128xf32>
    %43 = vector.broadcast %42 : vector<1x128xf32> to vector<16x128xf32>
    %44 = arith.mulf %41, %43 : vector<16x128xf32>
    %c0_16 = arith.constant 0 : index
    %c0_17 = arith.constant 0 : index
    %45 = vector.load %arg6[%c0_16, %c0_17] : memref<1x128xf32, #tpu.memory_space<vmem>>, vector<1x128xf32>
    %46 = vector.broadcast %45 : vector<1x128xf32> to vector<16x128xf32>
    %47 = arith.addf %44, %46 : vector<16x128xf32>
    %c0_18 = arith.constant 0 : index
    %c0_19 = arith.constant 0 : index
    %48 = vector.load %arg7[%c0_18, %c0_19] : memref<128x128xf32, #tpu.memory_space<vmem>>, vector<128x128xf32>
    %cst_20 = arith.constant dense<0.000000e+00> : vector<16x128xf32>
    %49 = tpu.matmul %47, %48, %cst_20 {dimension_numbers = #tpu.dot_dimension_numbers<[1], [0], [0], [1], [0, 0, 1, 1], [], []>} : vector<16x128xf32>, vector<128x128xf32>, vector<16x128xf32> -> vector<16x128xf32>
    %c0_21 = arith.constant 0 : index
    %c0_22 = arith.constant 0 : index
    %50 = vector.load %arg8[%c0_21, %c0_22] : memref<1x128xf32, #tpu.memory_space<vmem>>, vector<1x128xf32>
    %51 = vector.broadcast %50 : vector<1x128xf32> to vector<16x128xf32>
    %52 = arith.addf %49, %51 : vector<16x128xf32>
    %53 = arith.mulf %52, %52 : vector<16x128xf32>
    %54 = arith.mulf %52, %53 : vector<16x128xf32>
    %cst_23 = arith.constant 4.471500e-02 : f32
    %55 = vector.broadcast %cst_23 : f32 to vector<16x128xf32>
    %56 = arith.mulf %55, %54 : vector<16x128xf32>
    %57 = arith.addf %52, %56 : vector<16x128xf32>
    %cst_24 = arith.constant 0.797884583 : f32
    %58 = vector.broadcast %cst_24 : f32 to vector<16x128xf32>
    %59 = arith.mulf %58, %57 : vector<16x128xf32>
    %60 = math.tanh %59 : vector<16x128xf32>
    %cst_25 = arith.constant 1.000000e+00 : f32
    %61 = vector.broadcast %cst_25 : f32 to vector<16x128xf32>
    %62 = arith.addf %61, %60 : vector<16x128xf32>
    %cst_26 = arith.constant 5.000000e-01 : f32
    %63 = vector.broadcast %cst_26 : f32 to vector<16x128xf32>
    %64 = arith.mulf %63, %62 : vector<16x128xf32>
    %65 = arith.mulf %52, %64 : vector<16x128xf32>
    %cst_27 = arith.constant dense<0.000000e+00> : vector<16xf32>
    %66 = vector.multi_reduction <add>, %65, %cst_27 [1] : vector<16x128xf32> to vector<16xf32>
    %67 = vector.shape_cast %66 : vector<16xf32> to vector<16x1xf32>
    %cst_28 = arith.constant 6.250000e-02 : f32
    %68 = vector.broadcast %cst_28 : f32 to vector<16x1xf32>
    %69 = arith.mulf %67, %68 : vector<16x1xf32>
    %70 = vector.broadcast %69 : vector<16x1xf32> to vector<16x128xf32>
    %71 = arith.subf %65, %70 : vector<16x128xf32>
    %72 = tpu.iota {dimensions = array<i32: 1>} : vector<1x128xi32>
    %c16_i32 = arith.constant 16 : i32
    %73 = vector.broadcast %c16_i32 : i32 to vector<1x128xi32>
    %74 = arith.cmpi slt, %72, %73 : vector<1x128xi32>
    %75 = arith.extui %74 : vector<1x128xi1> to vector<1x128xi32>
    %76 = arith.sitofp %75 : vector<1x128xi32> to vector<1x128xf32>
    %77 = vector.broadcast %76 : vector<1x128xf32> to vector<16x128xf32>
    %78 = arith.mulf %71, %77 : vector<16x128xf32>
    %79 = arith.mulf %78, %78 : vector<16x128xf32>
    %cst_29 = arith.constant dense<0.000000e+00> : vector<16xf32>
    %80 = vector.multi_reduction <add>, %79, %cst_29 [1] : vector<16x128xf32> to vector<16xf32>
    %81 = vector.shape_cast %80 : vector<16xf32> to vector<16x1xf32>
    %cst_30 = arith.constant 6.250000e-02 : f32
    %82 = vector.broadcast %cst_30 : f32 to vector<16x1xf32>
    %83 = arith.mulf %81, %82 : vector<16x1xf32>
    %cst_31 = arith.constant 9.99999974E-6 : f32
    %84 = vector.broadcast %cst_31 : f32 to vector<16x1xf32>
    %85 = arith.addf %83, %84 : vector<16x1xf32>
    %86 = math.rsqrt %85 : vector<16x1xf32>
    %87 = vector.broadcast %86 : vector<16x1xf32> to vector<16x128xf32>
    %88 = arith.mulf %78, %87 : vector<16x128xf32>
    %c0_32 = arith.constant 0 : index
    %c0_33 = arith.constant 0 : index
    %89 = vector.load %arg9[%c0_32, %c0_33] : memref<1x128xf32, #tpu.memory_space<vmem>>, vector<1x128xf32>
    %90 = vector.broadcast %89 : vector<1x128xf32> to vector<16x128xf32>
    %91 = arith.mulf %88, %90 : vector<16x128xf32>
    %c0_34 = arith.constant 0 : index
    %c0_35 = arith.constant 0 : index
    %92 = vector.load %arg10[%c0_34, %c0_35] : memref<1x128xf32, #tpu.memory_space<vmem>>, vector<1x128xf32>
    %93 = vector.broadcast %92 : vector<1x128xf32> to vector<16x128xf32>
    %94 = arith.addf %91, %93 : vector<16x128xf32>
    %c0_36 = arith.constant 0 : index
    %c0_37 = arith.constant 0 : index
    %95 = vector.load %arg11[%c0_36, %c0_37] : memref<128x128xf32, #tpu.memory_space<vmem>>, vector<128x128xf32>
    %cst_38 = arith.constant dense<0.000000e+00> : vector<16x128xf32>
    %96 = tpu.matmul %94, %95, %cst_38 {dimension_numbers = #tpu.dot_dimension_numbers<[1], [0], [0], [1], [0, 0, 1, 1], [], []>} : vector<16x128xf32>, vector<128x128xf32>, vector<16x128xf32> -> vector<16x128xf32>
    %c0_39 = arith.constant 0 : index
    %c0_40 = arith.constant 0 : index
    %97 = vector.load %arg12[%c0_39, %c0_40] : memref<1x128xf32, #tpu.memory_space<vmem>>, vector<1x128xf32>
    %98 = vector.broadcast %97 : vector<1x128xf32> to vector<16x128xf32>
    %99 = arith.addf %96, %98 : vector<16x128xf32>
    %100 = arith.mulf %99, %99 : vector<16x128xf32>
    %101 = arith.mulf %99, %100 : vector<16x128xf32>
    %cst_41 = arith.constant 4.471500e-02 : f32
    %102 = vector.broadcast %cst_41 : f32 to vector<16x128xf32>
    %103 = arith.mulf %102, %101 : vector<16x128xf32>
    %104 = arith.addf %99, %103 : vector<16x128xf32>
    %cst_42 = arith.constant 0.797884583 : f32
    %105 = vector.broadcast %cst_42 : f32 to vector<16x128xf32>
    %106 = arith.mulf %105, %104 : vector<16x128xf32>
    %107 = math.tanh %106 : vector<16x128xf32>
    %cst_43 = arith.constant 1.000000e+00 : f32
    %108 = vector.broadcast %cst_43 : f32 to vector<16x128xf32>
    %109 = arith.addf %108, %107 : vector<16x128xf32>
    %cst_44 = arith.constant 5.000000e-01 : f32
    %110 = vector.broadcast %cst_44 : f32 to vector<16x128xf32>
    %111 = arith.mulf %110, %109 : vector<16x128xf32>
    %112 = arith.mulf %99, %111 : vector<16x128xf32>
    %cst_45 = arith.constant dense<0.000000e+00> : vector<16xf32>
    %113 = vector.multi_reduction <add>, %112, %cst_45 [1] : vector<16x128xf32> to vector<16xf32>
    %114 = vector.shape_cast %113 : vector<16xf32> to vector<16x1xf32>
    %cst_46 = arith.constant 3.125000e-02 : f32
    %115 = vector.broadcast %cst_46 : f32 to vector<16x1xf32>
    %116 = arith.mulf %114, %115 : vector<16x1xf32>
    %117 = vector.broadcast %116 : vector<16x1xf32> to vector<16x128xf32>
    %118 = arith.subf %112, %117 : vector<16x128xf32>
    %119 = tpu.iota {dimensions = array<i32: 1>} : vector<1x128xi32>
    %c32_i32 = arith.constant 32 : i32
    %120 = vector.broadcast %c32_i32 : i32 to vector<1x128xi32>
    %121 = arith.cmpi slt, %119, %120 : vector<1x128xi32>
    %122 = arith.extui %121 : vector<1x128xi1> to vector<1x128xi32>
    %123 = arith.sitofp %122 : vector<1x128xi32> to vector<1x128xf32>
    %124 = vector.broadcast %123 : vector<1x128xf32> to vector<16x128xf32>
    %125 = arith.mulf %118, %124 : vector<16x128xf32>
    %126 = arith.mulf %125, %125 : vector<16x128xf32>
    %cst_47 = arith.constant dense<0.000000e+00> : vector<16xf32>
    %127 = vector.multi_reduction <add>, %126, %cst_47 [1] : vector<16x128xf32> to vector<16xf32>
    %128 = vector.shape_cast %127 : vector<16xf32> to vector<16x1xf32>
    %cst_48 = arith.constant 3.125000e-02 : f32
    %129 = vector.broadcast %cst_48 : f32 to vector<16x1xf32>
    %130 = arith.mulf %128, %129 : vector<16x1xf32>
    %cst_49 = arith.constant 9.99999974E-6 : f32
    %131 = vector.broadcast %cst_49 : f32 to vector<16x1xf32>
    %132 = arith.addf %130, %131 : vector<16x1xf32>
    %133 = math.rsqrt %132 : vector<16x1xf32>
    %134 = vector.broadcast %133 : vector<16x1xf32> to vector<16x128xf32>
    %135 = arith.mulf %125, %134 : vector<16x128xf32>
    %c0_50 = arith.constant 0 : index
    %c0_51 = arith.constant 0 : index
    %136 = vector.load %arg13[%c0_50, %c0_51] : memref<1x128xf32, #tpu.memory_space<vmem>>, vector<1x128xf32>
    %137 = vector.broadcast %136 : vector<1x128xf32> to vector<16x128xf32>
    %138 = arith.mulf %135, %137 : vector<16x128xf32>
    %c0_52 = arith.constant 0 : index
    %c0_53 = arith.constant 0 : index
    %139 = vector.load %arg14[%c0_52, %c0_53] : memref<1x128xf32, #tpu.memory_space<vmem>>, vector<1x128xf32>
    %140 = vector.broadcast %139 : vector<1x128xf32> to vector<16x128xf32>
    %141 = arith.addf %138, %140 : vector<16x128xf32>
    %c0_54 = arith.constant 0 : index
    %c0_55 = arith.constant 0 : index
    %142 = vector.load %arg2[%c0_54, %c0_55] : memref<16x1xf32, #tpu.memory_space<vmem>>, vector<16x1xf32>
    %143 = vector.broadcast %142 : vector<16x1xf32> to vector<16x128xf32>
    %144 = arith.mulf %141, %143 : vector<16x128xf32>
    %c0_56 = arith.constant 0 : index
    %c0_57 = arith.constant 0 : index
    %145 = vector.load %arg15[%c0_56, %c0_57] : memref<16x128xf32, #tpu.memory_space<vmem>>, vector<16x128xf32>
    tpu.vector_store %arg15[%c0_56, %c0_57], %144 {strides = array<i32>} : memref<16x128xf32, #tpu.memory_space<vmem>>, vector<16x128xf32>,
    return
  }
  func.func @transform_0(%arg0: i32) -> (i32, i32) {
    %c0_i32 = arith.constant 0 : i32
    %c0_i32_0 = arith.constant 0 : i32
    return %arg0, %c0_i32 : i32, i32
  }
  func.func @transform_1(%arg0: i32) -> (i32, i32) {
    %c0_i32 = arith.constant 0 : i32
    %c0_i32_0 = arith.constant 0 : i32
    return %arg0, %c0_i32 : i32, i32
  }
  func.func @transform_2(%arg0: i32) -> (i32, i32) {
    %c0_i32 = arith.constant 0 : i32
    %c0_i32_0 = arith.constant 0 : i32
    %c0_i32_1 = arith.constant 0 : i32
    return %c0_i32, %c0_i32_0 : i32, i32
  }
  func.func @transform_3(%arg0: i32) -> (i32, i32) {
    %c0_i32 = arith.constant 0 : i32
    %c0_i32_0 = arith.constant 0 : i32
    %c0_i32_1 = arith.constant 0 : i32
    return %c0_i32, %c0_i32_0 : i32, i32
  }
  func.func @transform_4(%arg0: i32) -> (i32, i32) {
    %c0_i32 = arith.constant 0 : i32
    %c0_i32_0 = arith.constant 0 : i32
    %c0_i32_1 = arith.constant 0 : i32
    return %c0_i32, %c0_i32_0 : i32, i32
  }
  func.func @transform_5(%arg0: i32) -> (i32, i32) {
    %c0_i32 = arith.constant 0 : i32
    %c0_i32_0 = arith.constant 0 : i32
    %c0_i32_1 = arith.constant 0 : i32
    return %c0_i32, %c0_i32_0 : i32, i32
  }
  func.func @transform_6(%arg0: i32) -> (i32, i32) {
    %c0_i32 = arith.constant 0 : i32
    %c0_i32_0 = arith.constant 0 : i32
    %c0_i32_1 = arith.constant 0 : i32
    return %c0_i32, %c0_i32_0 : i32, i32
  }
  func.func @transform_7(%arg0: i32) -> (i32, i32) {
    %c0_i32 = arith.constant 0 : i32
    %c0_i32_0 = arith.constant 0 : i32
    %c0_i32_1 = arith.constant 0 : i32
    return %c0_i32, %c0_i32_0 : i32, i32
  }
  func.func @transform_8(%arg0: i32) -> (i32, i32) {
    %c0_i32 = arith.constant 0 : i32
    %c0_i32_0 = arith.constant 0 : i32
    %c0_i32_1 = arith.constant 0 : i32
    return %c0_i32, %c0_i32_0 : i32, i32
  }
  func.func @transform_9(%arg0: i32) -> (i32, i32) {
    %c0_i32 = arith.constant 0 : i32
    %c0_i32_0 = arith.constant 0 : i32
    %c0_i32_1 = arith.constant 0 : i32
    return %c0_i32, %c0_i32_0 : i32, i32
  }
  func.func @transform_10(%arg0: i32) -> (i32, i32) {
    %c0_i32 = arith.constant 0 : i32
    %c0_i32_0 = arith.constant 0 : i32
    %c0_i32_1 = arith.constant 0 : i32
    return %c0_i32, %c0_i32_0 : i32, i32
  }
  func.func @transform_11(%arg0: i32) -> (i32, i32) {
    %c0_i32 = arith.constant 0 : i32
    %c0_i32_0 = arith.constant 0 : i32
    %c0_i32_1 = arith.constant 0 : i32
    return %c0_i32, %c0_i32_0 : i32, i32
  }
  func.func @transform_12(%arg0: i32) -> (i32, i32) {
    %c0_i32 = arith.constant 0 : i32
    %c0_i32_0 = arith.constant 0 : i32
    %c0_i32_1 = arith.constant 0 : i32
    return %c0_i32, %c0_i32_0 : i32, i32
  }
  func.func @transform_13(%arg0: i32) -> (i32, i32) {
    %c0_i32 = arith.constant 0 : i32
    %c0_i32_0 = arith.constant 0 : i32
    %c0_i32_1 = arith.constant 0 : i32
    return %c0_i32, %c0_i32_0 : i32, i32
  }
  func.func @transform_14(%arg0: i32) -> (i32, i32) {
    %c0_i32 = arith.constant 0 : i32
    %c0_i32_0 = arith.constant 0 : i32
    return %arg0, %c0_i32 : i32, i32
  }
}

</mosaic_0001>

<llo_original>
// kernel: tpu_custom_call.1
$region0: #{tpu_custom_call.1}
  #allocation0 [shape = 'u32[]', space=smem, size = 0x4, offset = 0x4, fixed_abs, tag = 'smem constant byte address 0x4 - core index']
  #allocation1 [shape = 'u32[144,128]{1,0:T(1,128)}', space=vmem, size = 0x12000, scoped, tag = 'internal scratch']
  %s0 = inlined_call_operand.vmem [shape: f32[16,8], index: 0, kind: input, shape index: {}]
  %s1 = inlined_call_operand.vmem [shape: f32[16,1], index: 1, kind: input, shape index: {}]
  %s2 = inlined_call_operand.vmem [shape: f32[8,128], index: 2, kind: input, shape index: {}]
  %s3 = inlined_call_operand.vmem [shape: f32[1,128], index: 3, kind: input, shape index: {}]
  %s4 = inlined_call_operand.vmem [shape: f32[1,128], index: 4, kind: input, shape index: {}]
  %s5 = inlined_call_operand.vmem [shape: f32[1,128], index: 5, kind: input, shape index: {}]
  %s6 = inlined_call_operand.hbm [shape: f32[128,128], index: 6, kind: input, shape index: {}]
  %s7 = inlined_call_operand.vmem [shape: f32[1,128], index: 7, kind: input, shape index: {}]
  %s8 = inlined_call_operand.vmem [shape: f32[1,128], index: 8, kind: input, shape index: {}]
  %s9 = inlined_call_operand.vmem [shape: f32[1,128], index: 9, kind: input, shape index: {}]
  %s10 = inlined_call_operand.hbm [shape: f32[128,128], index: 10, kind: input, shape index: {}]
  %s11 = inlined_call_operand.vmem [shape: f32[1,128], index: 11, kind: input, shape index: {}]
  %s12 = inlined_call_operand.vmem [shape: f32[1,128], index: 12, kind: input, shape index: {}]
  %s13 = inlined_call_operand.vmem [shape: f32[1,128], index: 13, kind: input, shape index: {}]
  %s14 = inlined_call_operand.hbm [shape: f32[16,128], index: 14, kind: output, shape index: {}]
  %s15 = sld [smem:[#allocation0]]
  $region74: #{tpu_custom_call.1} parent=0
    _
  %s17 = ssub.s32 1, %s15
  %s18 = scalar_select 0, %s17, %s15
  $region1: #{tpu_custom_call.1} parent=0
    #allocation2 [shape = 'u8[65536]{0}', space=vmem, size = 0x10000, scoped, tag = 'input window, operand 6, single buffered']
    #allocation3 [shape = 's32[1]{0}', space=sflag, size = 0x4, scoped, tag = 'scoped memory for tpu_custom_call.1']
    #allocation4 [shape = 's32[1]{0}', space=sflag, size = 0x4, scoped, tag = 'scoped memory for tpu_custom_call.1']
    #allocation5 [shape = 'u8[65536]{0}', space=vmem, size = 0x10000, scoped, tag = 'input window, operand 10, single buffered']
    #allocation6 [shape = 's32[1]{0}', space=sflag, size = 0x4, scoped, tag = 'scoped memory for tpu_custom_call.1']
    #allocation7 [shape = 'u8[8192]{0}', space=vmem, size = 0x2000, scoped, tag = 'output window, operand 0, single buffered']
    %19 = vsyncpa [#allocation3], 0
    %20 = vsyncpa [#allocation6], 0
    %21 = vsyncpa [#allocation4], 0
    // Predicated region
    $region2: #{tpu_custom_call.1} parent=1 // pred_check
      _
    $region3: #{tpu_custom_call.1} parent=1 // pred_check_branch
      %23 = sbr.rel (0) target = $region5
    $region4: #{tpu_custom_call.1} parent=1 // pred_region
      _
    $region5: #{tpu_custom_call.1} parent=1 // pred_fallthru
      _
    // Predicated region
    $region6: #{tpu_custom_call.1} parent=1 // pred_check
      _
    $region7: #{tpu_custom_call.1} parent=1 // pred_check_branch
      %25 = sbr.rel (0) target = $region9
    $region8: #{tpu_custom_call.1} parent=1 // pred_region
      _
    $region9: #{tpu_custom_call.1} parent=1 // pred_fallthru
      _
    // Predicated region
    $region10: #{tpu_custom_call.1} parent=1 // pred_check
      _
    $region11: #{tpu_custom_call.1} parent=1 // pred_check_branch
      %27 = sbr.rel (0) target = $region13
    $region12: #{tpu_custom_call.1} parent=1 // pred_region
      _
    $region13: #{tpu_custom_call.1} parent=1 // pred_fallthru
      _
    // Predicated region
    $region14: #{tpu_custom_call.1} parent=1 // pred_check
      _
    $region15: #{tpu_custom_call.1} parent=1 // pred_check_branch
      %29 = sbr.rel (0) target = $region17
    $region16: #{tpu_custom_call.1} parent=1 // pred_region
      _
    $region17: #{tpu_custom_call.1} parent=1 // pred_fallthru
      _
    // Predicated region
    $region18: #{tpu_custom_call.1} parent=1 // pred_check
      _
    $region19: #{tpu_custom_call.1} parent=1 // pred_check_branch
      %31 = sbr.rel (0) target = $region21
    $region20: #{tpu_custom_call.1} parent=1 // pred_region
      _
    $region21: #{tpu_custom_call.1} parent=1 // pred_fallthru
      _
    // Predicated region
    $region22: #{tpu_custom_call.1} parent=1 // pred_check
      _
    $region23: #{tpu_custom_call.1} parent=1 // pred_check_branch
      %33 = sbr.rel (0) target = $region25
    $region24: #{tpu_custom_call.1} parent=1 // pred_region
      _
    $region25: #{tpu_custom_call.1} parent=1 // pred_fallthru
      _
    // Predicated region
    $region26: #{tpu_custom_call.1} parent=1 // pred_check
      _
    $region27: #{tpu_custom_call.1} parent=1 // pred_check_branch
      %35 = sbr.rel (0) target = $region29
    $region28: #{tpu_custom_call.1} parent=1 // pred_region
      %s37 = ssub.s32 2048, 2048
      %38 = vsyncadd [#allocation3], %s37
      %s39 = sshll.u32 [#allocation2], 4
      %s40 = int_to_ptr.vmem [resolvable:$true] %s39
      %45 = dma.hbm_to_vmem [thread:$0]  %s6, 2048, %s40, [#allocation3], 128, 128, 8
    $region29: #{tpu_custom_call.1} parent=1 // pred_fallthru
      _
    // Predicated region
    $region30: #{tpu_custom_call.1} parent=1 // pred_check
      _
    $region31: #{tpu_custom_call.1} parent=1 // pred_check_branch
      %47 = sbr.rel (0) target = $region33
    $region32: #{tpu_custom_call.1} parent=1 // pred_region
      _
    $region33: #{tpu_custom_call.1} parent=1 // pred_fallthru
      _
    // Predicated region
    $region34: #{tpu_custom_call.1} parent=1 // pred_check
      _
    $region35: #{tpu_custom_call.1} parent=1 // pred_check_branch
      %49 = sbr.rel (0) target = $region37
    $region36: #{tpu_custom_call.1} parent=1 // pred_region
      _
    $region37: #{tpu_custom_call.1} parent=1 // pred_fallthru
      _
    // Predicated region
    $region38: #{tpu_custom_call.1} parent=1 // pred_check
      _
    $region39: #{tpu_custom_call.1} parent=1 // pred_check_branch
      %51 = sbr.rel (0) target = $region41
    $region40: #{tpu_custom_call.1} parent=1 // pred_region
      _
    $region41: #{tpu_custom_call.1} parent=1 // pred_fallthru
      _
    // Predicated region
    $region42: #{tpu_custom_call.1} parent=1 // pred_check
      _
    $region43: #{tpu_custom_call.1} parent=1 // pred_check_branch
      %53 = sbr.rel (0) target = $region45
    $region44: #{tpu_custom_call.1} parent=1 // pred_region
      %s55 = ssub.s32 2048, 2048
      %56 = vsyncadd [#allocation6], %s55
      %s57 = sshll.u32 [#allocation5], 4
      %s58 = int_to_ptr.vmem [resolvable:$true] %s57
      %63 = dma.hbm_to_vmem [thread:$0]  %s10, 2048, %s58, [#allocation6], 128, 128, 8
    $region45: #{tpu_custom_call.1} parent=1 // pred_fallthru
      _
    // Predicated region
    $region46: #{tpu_custom_call.1} parent=1 // pred_check
      _
    $region47: #{tpu_custom_call.1} parent=1 // pred_check_branch
      %65 = sbr.rel (0) target = $region49
    $region48: #{tpu_custom_call.1} parent=1 // pred_region
      _
    $region49: #{tpu_custom_call.1} parent=1 // pred_fallthru
      _
    // Predicated region
    $region50: #{tpu_custom_call.1} parent=1 // pred_check
      _
    $region51: #{tpu_custom_call.1} parent=1 // pred_check_branch
      %67 = sbr.rel (0) target = $region53
    $region52: #{tpu_custom_call.1} parent=1 // pred_region
      _
    $region53: #{tpu_custom_call.1} parent=1 // pred_fallthru
      _
    // Predicated region
    $region54: #{tpu_custom_call.1} parent=1 // pred_check
      _
    $region55: #{tpu_custom_call.1} parent=1 // pred_check_branch
      %69 = sbr.rel (0) target = $region57
    $region56: #{tpu_custom_call.1} parent=1 // pred_region
      _
    $region57: #{tpu_custom_call.1} parent=1 // pred_fallthru
      _
    // Predicated region
    $region58: #{tpu_custom_call.1} parent=1 // pred_check
      _
    $region59: #{tpu_custom_call.1} parent=1 // pred_check_branch
      %71 = sbr.rel (0) target = $region61
    $region60: #{tpu_custom_call.1} parent=1 // pred_region
      %72 = dma.done [#allocation3], 2048
    $region61: #{tpu_custom_call.1} parent=1 // pred_fallthru
      _
    // Predicated region
    $region62: #{tpu_custom_call.1} parent=1 // pred_check
      _
    $region63: #{tpu_custom_call.1} parent=1 // pred_check_branch
      %74 = sbr.rel (0) target = $region65
    $region64: #{tpu_custom_call.1} parent=1 // pred_region
      %75 = dma.done [#allocation6], 2048
    $region65: #{tpu_custom_call.1} parent=1 // pred_fallthru
      _
    %v76 = vld [vmem:[%s0] sm:$0xff]
    %v77 = vld [vmem:[%s0 + $0x8] sm:$0xff]
    %v78 = vld [vmem:[%s2] sm:$0xff]
    %v79 = vld [vmem:[%s3] sm:$0x1]
    %v81 = vlaneseq
    %v82 = vshrl.u32 %v81, 7
    %v83 = vsub.s32 0, %v82
    %v84 = vrot.slane %v79, %v83
    %vm86 = vcmask 64512
    %v88 = vsel %vm86, %v76, 0
    %v91 = vsel %vm86, %v77, 0
    %93 = vmatprep.subr.mxu0 0.0
    %94 = vmatpush1.msra.mxu0 0.0
    %95 = vmatprep.subr.mxu0 0.0
    %96 = vmatpush1.msra.mxu0 0.0
    %97 = vmatprep.subr.mxu0 0.0
    %98 = vmatpush1.msra.mxu0 0.0
    %99 = vmatprep.subr.mxu0 0.0
    %100 = vmatpush1.msra.mxu0 0.0
    %101 = vmatprep.subr.mxu0 0.0
    %102 = vmatpush1.msra.mxu0 0.0
    %103 = vmatprep.subr.mxu0 0.0
    %104 = vmatpush1.msra.mxu0 0.0
    %105 = vmatprep.subr.mxu0 0.0
    %106 = vmatpush1.msra.mxu0 0.0
    %107 = vmatprep.subr.mxu0 0.0
    %108 = vmatpush1.msra.mxu0 0.0
    %109 = vmatprep.subr.mxu0 0.0
    %110 = vmatpush1.msra.mxu0 0.0
    %111 = vmatprep.subr.mxu0 0.0
    %112 = vmatpush1.msra.mxu0 0.0
    %113 = vmatprep.subr.mxu0 0.0
    %114 = vmatpush1.msra.mxu0 0.0
    %115 = vmatprep.subr.mxu0 0.0
    %116 = vmatpush1.msra.mxu0 0.0
    %117 = vmatprep.subr.mxu0 0.0
    %118 = vmatpush1.msra.mxu0 0.0
    %119 = vmatprep.subr.mxu0 0.0
    %120 = vmatpush1.msra.mxu0 0.0
    %121 = vmatprep.subr.mxu0 0.0
    %122 = vmatpush1.msra.mxu0 0.0
    %123 = vmatprep.subr.mxu0 0.0
    %124 = vmatpush1.msra.mxu0 %v78
    %125 = vmatprep.subr.mxu0 0.0
    %126 = vmatpush2.msra.mxu0 0.0
    %127 = vmatprep.subr.mxu0 0.0
    %128 = vmatpush2.msra.mxu0 0.0
    %129 = vmatprep.subr.mxu0 0.0
    %130 = vmatpush2.msra.mxu0 0.0
    %131 = vmatprep.subr.mxu0 0.0
    %132 = vmatpush2.msra.mxu0 0.0
    %133 = vmatprep.subr.mxu0 0.0
    %134 = vmatpush2.msra.mxu0 0.0
    %135 = vmatprep.subr.mxu0 0.0
    %136 = vmatpush2.msra.mxu0 0.0
    %137 = vmatprep.subr.mxu0 0.0
    %138 = vmatpush2.msra.mxu0 0.0
    %139 = vmatprep.subr.mxu0 0.0
    %140 = vmatpush2.msra.mxu0 0.0
    %141 = vmatprep.subr.mxu0 0.0
    %142 = vmatpush2.msra.mxu0 0.0
    %143 = vmatprep.subr.mxu0 0.0
    %144 = vmatpush2.msra.mxu0 0.0
    %145 = vmatprep.subr.mxu0 0.0
    %146 = vmatpush2.msra.mxu0 0.0
    %147 = vmatprep.subr.mxu0 0.0
    %148 = vmatpush2.msra.mxu0 0.0
    %149 = vmatprep.subr.mxu0 0.0
    %150 = vmatpush2.msra.mxu0 0.0
    %151 = vmatprep.subr.mxu0 0.0
    %152 = vmatpush2.msra.mxu0 0.0
    %153 = vmatprep.subr.mxu0 0.0
    %154 = vmatpush2.msra.mxu0 0.0
    %155 = vmatprep.subr.mxu0 0.0
    %156 = vmatpush2.msra.mxu0 0.0
    %157 = vmatprep.mubr.f32.mxu0 0.0
    %158 = vmatmul.mubr.f32.gmra.mxu0 %v88
    %v159 = vpop.f32.mrf.mxu0
    %v160 = vadd.f32 %v84, %v159
    %v161 = vpop.f32.mrf.mxu0
    %162 = vmatprep.mubr.f32.mxu0 0.0
    %163 = vmatmul.mubr.f32.gmra.mxu0 %v91
    %v164 = vpop.f32.mrf.mxu0
    %v165 = vadd.f32 %v84, %v164
    %v166 = vpop.f32.mrf.mxu0
    %167 = vdwg.mxu0
    %v168 = vmul.f32 %v160, %v160
    %v169 = vmul.f32 %v165, %v165
    %v170 = vmul.f32 %v160, %v168
    %v171 = vmul.f32 %v165, %v169
    %v172 = vmul.f32 %v170, 0.044715
    %v173 = vmul.f32 %v171, 0.044715
    %v174 = vadd.f32 %v160, %v172
    %v175 = vadd.f32 %v165, %v173
    %v176 = vmul.f32 %v174, 0.7978846
    %v177 = vmul.f32 %v175, 0.7978846
    %v178 = vtanh.pop %v176
    %v179 = vtanh.pop %v177
    %v180 = vadd.f32 %v178, 1.0
    %v181 = vadd.f32 %v179, 1.0
    %v182 = vmul.f32 %v180, 0.5
    %v183 = vmul.f32 %v181, 0.5
    %v184 = vmul.f32 %v160, %v182
    %v185 = vmul.f32 %v165, %v183
    %186 = vadd.xlane.f32.xlu0 %v184
    %v187 = vpop.xlane.xlu0 %186
    %188 = vadd.xlane.f32.xlu0 %v185
    %v189 = vpop.xlane.xlu0 %188
    %v190 = vmul.f32 %v187, 0.125
    %v191 = vmul.f32 %v189, 0.125
    %v192 = vsub.f32 %v184, %v190
    %v193 = vsub.f32 %v185, %v191
    %v194 = vlaneseq
    %v195 = vand.u32 %v194, 127
    %vm196 = vcmp.lt.s32.totalorder %v195, 8
    %v197 = vsel %vm196, 1, 0
    %v198 = vcvt.s32.f32 %v197
    %v199 = vmul.f32 %v192, %v198
    %v200 = vmul.f32 %v193, %v198
    %v201 = vmul.f32 %v199, %v199
    %v202 = vmul.f32 %v200, %v200
    %203 = vadd.xlane.f32.xlu0 %v201
    %v204 = vpop.xlane.xlu0 %203
    %205 = vadd.xlane.f32.xlu0 %v202
    %v206 = vpop.xlane.xlu0 %205
    %v207 = vmul.f32 %v204, 0.125
    %v208 = vmul.f32 %v206, 0.125
    %v209 = vadd.f32 %v207, 1e-05
    %v210 = vadd.f32 %v208, 1e-05
    %v211 = vrsqrt.pop %v209
    %v212 = vrsqrt.pop %v210
    %v213 = vmul.f32 %v199, %v211
    %v214 = vmul.f32 %v200, %v212
    %v215 = vld [vmem:[%s4] sm:$0x1]
    %v217 = vlaneseq
    %v218 = vshrl.u32 %v217, 7
    %v219 = vsub.s32 0, %v218
    %v220 = vrot.slane %v215, %v219
    %v222 = vmul.f32 %v213, %v220
    %v223 = vmul.f32 %v214, %v220
    %v224 = vld [vmem:[%s5] sm:$0x1]
    %v226 = vlaneseq
    %v227 = vshrl.u32 %v226, 7
    %v228 = vsub.s32 0, %v227
    %v229 = vrot.slane %v224, %v228
    %v231 = vadd.f32 %v222, %v229
    %v232 = vadd.f32 %v223, %v229
    %v233 = vld [vmem:[#allocation2] sm:$0xff]
    %v234 = vld [vmem:[#allocation2 + $0x8] sm:$0xff]
    %v235 = vld [vmem:[#allocation2 + $0x10] sm:$0xff]
    %v236 = vld [vmem:[#allocation2 + $0x18] sm:$0xff]
    %v237 = vld [vmem:[#allocation2 + $0x20] sm:$0xff]
    %v238 = vld [vmem:[#allocation2 + $0x28] sm:$0xff]
    %v239 = vld [vmem:[#allocation2 + $0x30] sm:$0xff]
    %v240 = vld [vmem:[#allocation2 + $0x38] sm:$0xff]
    %v241 = vld [vmem:[#allocation2 + $0x40] sm:$0xff]
    %v242 = vld [vmem:[#allocation2 + $0x48] sm:$0xff]
    %v243 = vld [vmem:[#allocation2 + $0x50] sm:$0xff]
    %v244 = vld [vmem:[#allocation2 + $0x58] sm:$0xff]
    %v245 = vld [vmem:[#allocation2 + $0x60] sm:$0xff]
    %v246 = vld [vmem:[#allocation2 + $0x68] sm:$0xff]
    %v247 = vld [vmem:[#allocation2 + $0x70] sm:$0xff]
    %v248 = vld [vmem:[#allocation2 + $0x78] sm:$0xff]
    %v249 = vld [vmem:[%s7] sm:$0x1]
    %v251 = vlaneseq
    %v252 = vshrl.u32 %v251, 7
    %v253 = vsub.s32 0, %v252
    %v254 = vrot.slane %v249, %v253
    %256 = vmatprep.subr.mxu0 0.0
    %257 = vmatpush1.msra.mxu0 %v248
    %258 = vmatprep.subr.mxu0 0.0
    %259 = vmatpush1.msra.mxu0 %v247
    %260 = vmatprep.subr.mxu0 0.0
    %261 = vmatpush1.msra.mxu0 %v246
    %262 = vmatprep.subr.mxu0 0.0
    %263 = vmatpush1.msra.mxu0 %v245
    %264 = vmatprep.subr.mxu0 0.0
    %265 = vmatpush1.msra.mxu0 %v244
    %266 = vmatprep.subr.mxu0 0.0
    %267 = vmatpush1.msra.mxu0 %v243
    %268 = vmatprep.subr.mxu0 0.0
    %269 = vmatpush1.msra.mxu0 %v242
    %270 = vmatprep.subr.mxu0 0.0
    %271 = vmatpush1.msra.mxu0 %v241
    %272 = vmatprep.subr.mxu0 0.0
    %273 = vmatpush1.msra.mxu0 %v240
    %274 = vmatprep.subr.mxu0 0.0
    %275 = vmatpush1.msra.mxu0 %v239
    %276 = vmatprep.subr.mxu0 0.0
    %277 = vmatpush1.msra.mxu0 %v238
    %278 = vmatprep.subr.mxu0 0.0
    %279 = vmatpush1.msra.mxu0 %v237
    %280 = vmatprep.subr.mxu0 0.0
    %281 = vmatpush1.msra.mxu0 %v236
    %282 = vmatprep.subr.mxu0 0.0
    %283 = vmatpush1.msra.mxu0 %v235
    %284 = vmatprep.subr.mxu0 0.0
    %285 = vmatpush1.msra.mxu0 %v234
    %286 = vmatprep.subr.mxu0 0.0
    %287 = vmatpush1.msra.mxu0 %v233
    %288 = vmatprep.subr.mxu0 0.0
    %289 = vmatpush2.msra.mxu0 0.0
    %290 = vmatprep.subr.mxu0 0.0
    %291 = vmatpush2.msra.mxu0 0.0
    %292 = vmatprep.subr.mxu0 0.0
    %293 = vmatpush2.msra.mxu0 0.0
    %294 = vmatprep.subr.mxu0 0.0
    %295 = vmatpush2.msra.mxu0 0.0
    %296 = vmatprep.subr.mxu0 0.0
    %297 = vmatpush2.msra.mxu0 0.0
    %298 = vmatprep.subr.mxu0 0.0
    %299 = vmatpush2.msra.mxu0 0.0
    %300 = vmatprep.subr.mxu0 0.0
    %301 = vmatpush2.msra.mxu0 0.0
    %302 = vmatprep.subr.mxu0 0.0
    %303 = vmatpush2.msra.mxu0 0.0
    %304 = vmatprep.subr.mxu0 0.0
    %305 = vmatpush2.msra.mxu0 0.0
    %306 = vmatprep.subr.mxu0 0.0
    %307 = vmatpush2.msra.mxu0 0.0
    %308 = vmatprep.subr.mxu0 0.0
    %309 = vmatpush2.msra.mxu0 0.0
    %310 = vmatprep.subr.mxu0 0.0
    %311 = vmatpush2.msra.mxu0 0.0
    %312 = vmatprep.subr.mxu0 0.0
    %313 = vmatpush2.msra.mxu0 0.0
    %314 = vmatprep.subr.mxu0 0.0
    %315 = vmatpush2.msra.mxu0 0.0
    %316 = vmatprep.subr.mxu0 0.0
    %317 = vmatpush2.msra.mxu0 0.0
    %318 = vmatprep.subr.mxu0 0.0
    %319 = vmatpush2.msra.mxu0 0.0
    %320 = vmatprep.mubr.f32.mxu0 0.0
    %321 = vmatmul.mubr.f32.gmra.mxu0 %v231
    %v322 = vpop.f32.mrf.mxu0
    %v323 = vadd.f32 %v254, %v322
    %v324 = vpop.f32.mrf.mxu0
    %325 = vmatprep.mubr.f32.mxu0 0.0
    %326 = vmatmul.mubr.f32.gmra.mxu0 %v232
    %v327 = vpop.f32.mrf.mxu0
    %v328 = vadd.f32 %v254, %v327
    %v329 = vpop.f32.mrf.mxu0
    %330 = vdwg.mxu0
    %v331 = vmul.f32 %v323, %v323
    %v332 = vmul.f32 %v328, %v328
    %v333 = vmul.f32 %v323, %v331
    %v334 = vmul.f32 %v328, %v332
    %v335 = vmul.f32 %v333, 0.044715
    %v336 = vmul.f32 %v334, 0.044715
    %v337 = vadd.f32 %v323, %v335
    %v338 = vadd.f32 %v328, %v336
    %v339 = vmul.f32 %v337, 0.7978846
    %v340 = vmul.f32 %v338, 0.7978846
    %v341 = vtanh.pop %v339
    %v342 = vtanh.pop %v340
    %v343 = vadd.f32 %v341, 1.0
    %v344 = vadd.f32 %v342, 1.0
    %v345 = vmul.f32 %v343, 0.5
    %v346 = vmul.f32 %v344, 0.5
    %v347 = vmul.f32 %v323, %v345
    %v348 = vmul.f32 %v328, %v346
    %349 = vadd.xlane.f32.xlu0 %v347
    %v350 = vpop.xlane.xlu0 %349
    %351 = vadd.xlane.f32.xlu0 %v348
    %v352 = vpop.xlane.xlu0 %351
    %v353 = vmul.f32 %v350, 0.0625
    %v354 = vmul.f32 %v352, 0.0625
    %v355 = vsub.f32 %v347, %v353
    %v356 = vsub.f32 %v348, %v354
    %vm357 = vcmp.lt.s32.totalorder %v195, 16
    %v358 = vsel %vm357, 1, 0
    %v359 = vcvt.s32.f32 %v358
    %v360 = vmul.f32 %v355, %v359
    %v361 = vmul.f32 %v356, %v359
    %v362 = vmul.f32 %v360, %v360
    %v363 = vmul.f32 %v361, %v361
    %364 = vadd.xlane.f32.xlu0 %v362
    %v365 = vpop.xlane.xlu0 %364
    %366 = vadd.xlane.f32.xlu0 %v363
    %v367 = vpop.xlane.xlu0 %366
    %v368 = vmul.f32 %v365, 0.0625
    %v369 = vmul.f32 %v367, 0.0625
    %v370 = vadd.f32 %v368, 1e-05
    %v371 = vadd.f32 %v369, 1e-05
    %v372 = vrsqrt.pop %v370
    %v373 = vrsqrt.pop %v371
    %v374 = vmul.f32 %v360, %v372
    %v375 = vmul.f32 %v361, %v373
    %v376 = vld [vmem:[%s8] sm:$0x1]
    %v378 = vlaneseq
    %v379 = vshrl.u32 %v378, 7
    %v380 = vsub.s32 0, %v379
    %v381 = vrot.slane %v376, %v380
    %v383 = vmul.f32 %v374, %v381
    %v384 = vmul.f32 %v375, %v381
    %v385 = vld [vmem:[%s9] sm:$0x1]
    %v387 = vlaneseq
    %v388 = vshrl.u32 %v387, 7
    %v389 = vsub.s32 0, %v388
    %v390 = vrot.slane %v385, %v389
    %v392 = vadd.f32 %v383, %v390
    %v393 = vadd.f32 %v384, %v390
    %v394 = vld [vmem:[#allocation5] sm:$0xff]
    %v395 = vld [vmem:[#allocation5 + $0x8] sm:$0xff]
    %v396 = vld [vmem:[#allocation5 + $0x10] sm:$0xff]
    %v397 = vld [vmem:[#allocation5 + $0x18] sm:$0xff]
    %v398 = vld [vmem:[#allocation5 + $0x20] sm:$0xff]
    %v399 = vld [vmem:[#allocation5 + $0x28] sm:$0xff]
    %v400 = vld [vmem:[#allocation5 + $0x30] sm:$0xff]
    %v401 = vld [vmem:[#allocation5 + $0x38] sm:$0xff]
    %v402 = vld [vmem:[#allocation5 + $0x40] sm:$0xff]
    %v403 = vld [vmem:[#allocation5 + $0x48] sm:$0xff]
    %v404 = vld [vmem:[#allocation5 + $0x50] sm:$0xff]
    %v405 = vld [vmem:[#allocation5 + $0x58] sm:$0xff]
    %v406 = vld [vmem:[#allocation5 + $0x60] sm:$0xff]
    %v407 = vld [vmem:[#allocation5 + $0x68] sm:$0xff]
    %v408 = vld [vmem:[#allocation5 + $0x70] sm:$0xff]
    %v409 = vld [vmem:[#allocation5 + $0x78] sm:$0xff]
    %v410 = vld [vmem:[%s11] sm:$0x1]
    %v412 = vlaneseq
    %v413 = vshrl.u32 %v412, 7
    %v414 = vsub.s32 0, %v413
    %v415 = vrot.slane %v410, %v414
    %417 = vmatprep.subr.mxu0 0.0
    %418 = vmatpush1.msra.mxu0 %v409
    %419 = vmatprep.subr.mxu0 0.0
    %420 = vmatpush1.msra.mxu0 %v408
    %421 = vmatprep.subr.mxu0 0.0
    %422 = vmatpush1.msra.mxu0 %v407
    %423 = vmatprep.subr.mxu0 0.0
    %424 = vmatpush1.msra.mxu0 %v406
    %425 = vmatprep.subr.mxu0 0.0
    %426 = vmatpush1.msra.mxu0 %v405
    %427 = vmatprep.subr.mxu0 0.0
    %428 = vmatpush1.msra.mxu0 %v404
    %429 = vmatprep.subr.mxu0 0.0
    %430 = vmatpush1.msra.mxu0 %v403
    %431 = vmatprep.subr.mxu0 0.0
    %432 = vmatpush1.msra.mxu0 %v402
    %433 = vmatprep.subr.mxu0 0.0
    %434 = vmatpush1.msra.mxu0 %v401
    %435 = vmatprep.subr.mxu0 0.0
    %436 = vmatpush1.msra.mxu0 %v400
    %437 = vmatprep.subr.mxu0 0.0
    %438 = vmatpush1.msra.mxu0 %v399
    %439 = vmatprep.subr.mxu0 0.0
    %440 = vmatpush1.msra.mxu0 %v398
    %441 = vmatprep.subr.mxu0 0.0
    %442 = vmatpush1.msra.mxu0 %v397
    %443 = vmatprep.subr.mxu0 0.0
    %444 = vmatpush1.msra.mxu0 %v396
    %445 = vmatprep.subr.mxu0 0.0
    %446 = vmatpush1.msra.mxu0 %v395
    %447 = vmatprep.subr.mxu0 0.0
    %448 = vmatpush1.msra.mxu0 %v394
    %449 = vmatprep.subr.mxu0 0.0
    %450 = vmatpush2.msra.mxu0 0.0
    %451 = vmatprep.subr.mxu0 0.0
    %452 = vmatpush2.msra.mxu0 0.0
    %453 = vmatprep.subr.mxu0 0.0
    %454 = vmatpush2.msra.mxu0 0.0
    %455 = vmatprep.subr.mxu0 0.0
    %456 = vmatpush2.msra.mxu0 0.0
    %457 = vmatprep.subr.mxu0 0.0
    %458 = vmatpush2.msra.mxu0 0.0
    %459 = vmatprep.subr.mxu0 0.0
    %460 = vmatpush2.msra.mxu0 0.0
    %461 = vmatprep.subr.mxu0 0.0
    %462 = vmatpush2.msra.mxu0 0.0
    %463 = vmatprep.subr.mxu0 0.0
    %464 = vmatpush2.msra.mxu0 0.0
    %465 = vmatprep.subr.mxu0 0.0
    %466 = vmatpush2.msra.mxu0 0.0
    %467 = vmatprep.subr.mxu0 0.0
    %468 = vmatpush2.msra.mxu0 0.0
    %469 = vmatprep.subr.mxu0 0.0
    %470 = vmatpush2.msra.mxu0 0.0
    %471 = vmatprep.subr.mxu0 0.0
    %472 = vmatpush2.msra.mxu0 0.0
    %473 = vmatprep.subr.mxu0 0.0
    %474 = vmatpush2.msra.mxu0 0.0
    %475 = vmatprep.subr.mxu0 0.0
    %476 = vmatpush2.msra.mxu0 0.0
    %477 = vmatprep.subr.mxu0 0.0
    %478 = vmatpush2.msra.mxu0 0.0
    %479 = vmatprep.subr.mxu0 0.0
    %480 = vmatpush2.msra.mxu0 0.0
    %481 = vmatprep.mubr.f32.mxu0 0.0
    %482 = vmatmul.mubr.f32.gmra.mxu0 %v392
    %v483 = vpop.f32.mrf.mxu0
    %v484 = vadd.f32 %v415, %v483
    %v485 = vpop.f32.mrf.mxu0
    %486 = vmatprep.mubr.f32.mxu0 0.0
    %487 = vmatmul.mubr.f32.gmra.mxu0 %v393
    %v488 = vpop.f32.mrf.mxu0
    %v489 = vadd.f32 %v415, %v488
    %v490 = vpop.f32.mrf.mxu0
    %491 = vdwg.mxu0
    %v492 = vmul.f32 %v484, %v484
    %v493 = vmul.f32 %v489, %v489
    %v494 = vmul.f32 %v484, %v492
    %v495 = vmul.f32 %v489, %v493
    %v496 = vmul.f32 %v494, 0.044715
    %v497 = vmul.f32 %v495, 0.044715
    %v498 = vadd.f32 %v484, %v496
    %v499 = vadd.f32 %v489, %v497
    %v500 = vmul.f32 %v498, 0.7978846
    %v501 = vmul.f32 %v499, 0.7978846
    %v502 = vtanh.pop %v500
    %v503 = vtanh.pop %v501
    %v504 = vadd.f32 %v502, 1.0
    %v505 = vadd.f32 %v503, 1.0
    %v506 = vmul.f32 %v504, 0.5
    %v507 = vmul.f32 %v505, 0.5
    %v508 = vmul.f32 %v484, %v506
    %v509 = vmul.f32 %v489, %v507
    %510 = vadd.xlane.f32.xlu0 %v508
    %v511 = vpop.xlane.xlu0 %510
    %512 = vadd.xlane.f32.xlu0 %v509
    %v513 = vpop.xlane.xlu0 %512
    %v514 = vmul.f32 %v511, 0.03125
    %v515 = vmul.f32 %v513, 0.03125
    %v516 = vsub.f32 %v508, %v514
    %v517 = vsub.f32 %v509, %v515
    %vm518 = vcmp.lt.s32.totalorder %v195, 32
    %v519 = vsel %vm518, 1, 0
    %v520 = vcvt.s32.f32 %v519
    %v521 = vmul.f32 %v516, %v520
    %v522 = vmul.f32 %v517, %v520
    %v523 = vmul.f32 %v521, %v521
    %v524 = vmul.f32 %v522, %v522
    %525 = vadd.xlane.f32.xlu0 %v523
    %v526 = vpop.xlane.xlu0 %525
    %527 = vadd.xlane.f32.xlu0 %v524
    %v528 = vpop.xlane.xlu0 %527
    %v529 = vmul.f32 %v526, 0.03125
    %v530 = vmul.f32 %v528, 0.03125
    %v531 = vadd.f32 %v529, 1e-05
    %v532 = vadd.f32 %v530, 1e-05
    %v533 = vrsqrt.pop %v531
    %v534 = vrsqrt.pop %v532
    %v535 = vmul.f32 %v521, %v533
    %v536 = vmul.f32 %v522, %v534
    %v537 = vld [vmem:[%s12] sm:$0x1]
    %v539 = vlaneseq
    %v540 = vshrl.u32 %v539, 7
    %v541 = vsub.s32 0, %v540
    %v542 = vrot.slane %v537, %v541
    %v544 = vmul.f32 %v535, %v542
    %v545 = vmul.f32 %v536, %v542
    %v546 = vld [vmem:[%s13] sm:$0x1]
    %v548 = vlaneseq
    %v549 = vshrl.u32 %v548, 7
    %v550 = vsub.s32 0, %v549
    %v551 = vrot.slane %v546, %v550
    %v553 = vadd.f32 %v544, %v551
    %v554 = vadd.f32 %v545, %v551
    %v555 = vld [vmem:[%s1] sm:$0xff]
    %v556 = vld [vmem:[%s1 + $0x8] sm:$0xff]
    %558 = vset.pattern.permute.xlu0 0
    %559 = vperm.xlu0 %558, %v555
    %v560 = vpop.permute.xlu0 %559
    %563 = vset.pattern.permute.xlu0 0
    %564 = vperm.xlu0 %563, %v556
    %v565 = vpop.permute.xlu0 %564
    %v567 = vmul.f32 %v553, %v560
    %v568 = vmul.f32 %v554, %v565
    %569 = vst [vmem:[#allocation7] sm:$0xff] %v567
    %570 = vst [vmem:[#allocation7 + $0x8] sm:$0xff] %v568
    // Predicated region
    $region66: #{tpu_custom_call.1} parent=1 // pred_check
      _
    $region67: #{tpu_custom_call.1} parent=1 // pred_check_branch
      %572 = sbr.rel (0) target = $region69
    $region68: #{tpu_custom_call.1} parent=1 // pred_region
      %s574 = ssub.s32 256, 256
      %575 = vsyncadd [#allocation4], %s574
      %s576 = sshll.u32 [#allocation7], 4
      %s577 = int_to_ptr.vmem [resolvable:$true] %s576
      %582 = dma.vmem_to_hbm [thread:$0]  %s577, 256, %s14, [#allocation4], 128, 128, 8
    $region69: #{tpu_custom_call.1} parent=1 // pred_fallthru
      _
    // Predicated region
    $region70: #{tpu_custom_call.1} parent=1 // pred_check
      _
    $region71: #{tpu_custom_call.1} parent=1 // pred_check_branch
      %584 = sbr.rel (0) target = $region73
    $region72: #{tpu_custom_call.1} parent=1 // pred_region
      %585 = dma.done [#allocation4], 256
    $region73: #{tpu_custom_call.1} parent=1 // pred_fallthru
      _
    %586 = vsyncpa [#allocation3], 1
    %587 = vsyncpa [#allocation6], 1
    %588 = vsyncpa [#allocation4], 1

</llo_original>
